<compile_context>
chip_gen: v5e
topology: v5e:2x2
jax: 0.10.0
libtpu: 0.0.40
codegen_flags: <defaults>
</compile_context>

<pallas_src>
import jax
import jax.numpy as jnp
from jax.experimental import pallas as pl
from jax.experimental.pallas import tpu as pltpu


# ---------------------------------------------------------------------------
# Pallas kernel
# ---------------------------------------------------------------------------
def bigru_kernel(tok_ref,      # VMEM (T*Bp, 1) int32, time-major, batch-padded
                 table_ref,    # VMEM (2, V, 3H) bf16   precomposed emb @ W_ih^T
                 whh_ref,      # VMEM (2, H, 3H) bf16   stacked W_hh^T (gate cols r|z|n)
                 b_g_ref,      # VMEM (2, 1, 3H) f32    [b_r(f), b_z(f), b_in]  (r/z folded)
                 b_hn_ref,     # VMEM (2, 1, H)  f32    b_hn (kept separate, torch n-gate)
                 h0_ref,       # VMEM (2, Bp, H) f32
                 wout_ref,     # VMEM (2H, out)  bf16
                 bout_ref,     # VMEM (1, out)   f32
                 out_ref):     # VMEM (Bp, out)  f32
    TBp = tok_ref.shape[0]
    V = table_ref.shape[1]
    H3 = table_ref.shape[2]
    H = H3 // 3
    Bp = h0_ref.shape[1]
    T = TBp // Bp

    # ---- one-hot MXU gather: one_hot[i, v] = (tokens[i] == v)
    lane_ids = jax.lax.broadcasted_iota(jnp.int32, (TBp, V), 1)
    one_hot = (lane_ids == tok_ref[...]).astype(jnp.bfloat16)          # (TBp, V)

    # ---- all forward input-gate pre-activations in a single dot (biases folded)
    gates_f = (jnp.dot(one_hot, table_ref[0],
                       preferred_element_type=jnp.float32)
               + b_g_ref[0])                                            # (TBp, 3H) f32
    whh_f = whh_ref[0]                                                  # (H, 3H) bf16
    b_hn_f = b_hn_ref[0]                                                # (1, H)  f32

    def gru_step(g, hh, b_hn, h_prev):
        # g, hh: (Bp, 3H) f32 with lane blocks [r | z | n]
        rz = jax.nn.sigmoid(g[:, :2 * H] + hh[:, :2 * H])               # one EUP pass
        r = rz[:, :H]
        z = rz[:, H:]
        n = jnp.tanh(g[:, 2 * H:] + r * (hh[:, 2 * H:] + b_hn))
        return (1.0 - z) * n + z * h_prev

    # ---- forward recurrence: ONE (Bp,H)@(H,3H) dot per step on the serial chain
    h = h0_ref[0]                                                       # (Bp, H) f32
    for t in range(T):
        g = gates_f[t * Bp:(t + 1) * Bp]                                # sublane-aligned
        hh = jnp.dot(h.astype(jnp.bfloat16), whh_f,
                     preferred_element_type=jnp.float32)                # (Bp, 3H) f32
        h = gru_step(g, hh, b_hn_f, h)
    h_f = h                                                             # (Bp, H) f32

    # ---- backward half of output[-1]: ONE step on x_{T-1}
    one_hot_last = one_hot[(T - 1) * Bp:]                               # (Bp, V) bf16
    g_b = (jnp.dot(one_hot_last, table_ref[1],
                   preferred_element_type=jnp.float32)
           + b_g_ref[1])                                                # (Bp, 3H) f32
    hb0 = h0_ref[1]                                                     # (Bp, H) f32
    hh_b = jnp.dot(hb0.astype(jnp.bfloat16), whh_ref[1],
                   preferred_element_type=jnp.float32)
    h_b = gru_step(g_b, hh_b, b_hn_ref[1], hb0)                         # (Bp, H) f32

    # ---- fused output Linear: lane-concat (Bp, 2H) then a single dot
    h_cat = jnp.concatenate([h_f, h_b], axis=1).astype(jnp.bfloat16)    # (Bp, 2H)
    out_ref[...] = (jnp.dot(h_cat, wout_ref[...],
                            preferred_element_type=jnp.float32)
                    + bout_ref[...])


# ---------------------------------------------------------------------------
# Python wrapper
# ---------------------------------------------------------------------------
def bigru_forward(x_tokens, kp):
    """x_tokens: (B, T) int32 token ids.  kp: kernel-layout params.  -> (B, out) f32."""
    B, T = x_tokens.shape
    H = kp["h0"].shape[-1]
    out_size = kp["b_out"].shape[-1]

    # pad batch to full 8-row sublanes (MXU/vreg feed); padded rows are discarded
    Bp = ((max(B, 8) + 7) // 8) * 8

    tok_tm = jnp.transpose(x_tokens, (1, 0)).astype(jnp.int32)          # (T, B) time-major
    tok_tm = jnp.pad(tok_tm, ((0, 0), (0, Bp - B)))                     # (T, Bp)
    tok_flat = tok_tm.reshape(T * Bp, 1)

    h0 = jnp.pad(kp["h0"], ((0, 0), (0, Bp - B), (0, 0)))               # (2, Bp, H)

    vmem = pl.BlockSpec(memory_space=pltpu.MemorySpace.VMEM)
    args = (tok_flat, kp["table"], kp["whh"], kp["b_g"], kp["b_hn"],
            h0, kp["wout"], kp["b_out"])

    out_padded = pl.pallas_call(
        bigru_kernel,
        out_shape=jax.ShapeDtypeStruct((Bp, out_size), jnp.float32),
        in_specs=[vmem] * len(args),
        out_specs=vmem,
    )(*args)
    return out_padded[:B]


# ---------------------------------------------------------------------------
# Deterministic PyTorch-convention parameters and conversion to kernel layout
# ---------------------------------------------------------------------------
def make_torch_like_params(key, vocab_size, E, H, out_size, B):
    """Shapes follow nn.GRU / nn.Linear conventions (gate order r, z, n)."""
    ks = jax.random.split(key, 12)
    s = 1.0 / jnp.sqrt(H)

    def u(k, shape):
        return jax.random.uniform(k, shape, jnp.float32, -s, s)

    return dict(
        embedding=jax.random.normal(ks[0], (vocab_size, E), jnp.float32) * 0.1,
        w_ih_f=u(ks[1], (3 * H, E)), w_hh_f=u(ks[2], (3 * H, H)),
        b_ih_f=u(ks[3], (3 * H,)),   b_hh_f=u(ks[4], (3 * H,)),
        w_ih_b=u(ks[5], (3 * H, E)), w_hh_b=u(ks[6], (3 * H, H)),
        b_ih_b=u(ks[7], (3 * H,)),   b_hh_b=u(ks[8], (3 * H,)),
        w_out=u(ks[9], (out_size, 2 * H)), b_out=u(ks[10], (out_size,)),
        # torch.randn hidden state in the reference forward -> deterministic here
        h0=jax.random.normal(ks[11], (2, B, H), jnp.float32),
    )


def prepare_kernel_params(p, H):
    """Pre-compose embedding with input projections (f32, single bf16 cast),
    stack recurrent weights per direction as (H, 3H), fold r/z biases."""
    def compose_table(emb, w_ih):          # (V,E)f32 @ (E,3H)f32 -> (V,3H) bf16
        return (emb @ w_ih.T).astype(jnp.bfloat16)

    def stack_whh(w_hh):                   # (3H,H) -> (H,3H) bf16, cols [r|z|n]
        return w_hh.T.astype(jnp.bfloat16)

    def gate_bias(b_ih, b_hh):             # -> (1,3H) f32 [b_r+b_hr | b_z+b_hz | b_in]
        return jnp.concatenate(
            [b_ih[:2 * H] + b_hh[:2 * H], b_ih[2 * H:]]).reshape(1, 3 * H)

    def hn_bias(b_hh):                     # -> (1,H) f32
        return b_hh[2 * H:].reshape(1, H)

    return dict(
        table=jnp.stack([compose_table(p["embedding"], p["w_ih_f"]),
                         compose_table(p["embedding"], p["w_ih_b"])]),   # (2,V,3H)
        whh=jnp.stack([stack_whh(p["w_hh_f"]), stack_whh(p["w_hh_b"])]), # (2,H,3H)
        b_g=jnp.stack([gate_bias(p["b_ih_f"], p["b_hh_f"]),
                       gate_bias(p["b_ih_b"], p["b_hh_b"])]),            # (2,1,3H)
        b_hn=jnp.stack([hn_bias(p["b_hh_f"]), hn_bias(p["b_hh_b"])]),    # (2,1,H)
        h0=p["h0"],
        wout=p["w_out"].T.astype(jnp.bfloat16),                          # (2H,out)
        b_out=p["b_out"].reshape(1, -1),                                 # (1,out)
    )


# ---------------------------------------------------------------------------
if __name__ == "__main__":
    # small shapes consistent with the module's forward
    vocab_size, embedding_dim, hidden_dim, out_size = 32, 16, 32, 8
    batch_size, seq_len = 2, 8
    # note: dropout has no effect with n_layer=1 (matches PyTorch behavior)

    key = jax.random.PRNGKey(0)
    k_par, k_tok = jax.random.split(key)
    torch_params = make_torch_like_params(k_par, vocab_size, embedding_dim,
                                          hidden_dim, out_size, batch_size)
    kparams = prepare_kernel_params(torch_params, hidden_dim)
    x_tokens = jax.random.randint(k_tok, (batch_size, seq_len), 0, vocab_size,
                                  dtype=jnp.int32)

    out = bigru_forward(x_tokens, kparams)
    out = jax.block_until_ready(out)
    assert out.shape == (batch_size, out_size), out.shape
    print("KERNEL_OK")
</pallas_src>

<mosaic_0001>
module attributes {stable_mosaic.version = 11 : i64} {
  func.func @bigru_kernel(%arg0: memref<64x1xi32, #tpu.memory_space<vmem>>, %arg1: memref<2x32x96xbf16, #tpu.memory_space<vmem>>, %arg2: memref<2x32x96xbf16, #tpu.memory_space<vmem>>, %arg3: memref<2x1x96xf32, #tpu.memory_space<vmem>>, %arg4: memref<2x1x32xf32, #tpu.memory_space<vmem>>, %arg5: memref<2x8x32xf32, #tpu.memory_space<vmem>>, %arg6: memref<64x8xbf16, #tpu.memory_space<vmem>>, %arg7: memref<1x8xf32, #tpu.memory_space<vmem>>, %arg8: memref<8x8xf32, #tpu.memory_space<vmem>>) attributes {dimension_semantics = [], scalar_prefetch = 0 : i64, scratch_operands = 0 : i64, tpu.core_type = #tpu.core_type<tc>} {
    %0 = tpu.iota {dimensions = array<i32: 1>} : vector<64x32xi32>
    %c0 = arith.constant 0 : index
    %c0_0 = arith.constant 0 : index
    %1 = vector.load %arg0[%c0, %c0_0] : memref<64x1xi32, #tpu.memory_space<vmem>>, vector<64x1xi32>
    %2 = vector.broadcast %1 : vector<64x1xi32> to vector<64x32xi32>
    %3 = arith.cmpi eq, %0, %2 : vector<64x32xi32>
    %4 = arith.extui %3 : vector<64x32xi1> to vector<64x32xi32>
    %5 = arith.sitofp %4 : vector<64x32xi32> to vector<64x32xf32>
    %6 = arith.truncf %5 : vector<64x32xf32> to vector<64x32xbf16>
    %c0_1 = arith.constant 0 : index
    %c0_2 = arith.constant 0 : index
    %c0_3 = arith.constant 0 : index
    %7 = vector.load %arg1[%c0_1, %c0_2, %c0_3] : memref<2x32x96xbf16, #tpu.memory_space<vmem>>, vector<1x32x96xbf16>
    %8 = vector.shape_cast %7 : vector<1x32x96xbf16> to vector<32x96xbf16>
    %cst = arith.constant dense<0.000000e+00> : vector<64x96xf32>
    %9 = tpu.matmul %6, %8, %cst {dimension_numbers = #tpu.dot_dimension_numbers<[1], [0], [0], [1], [0, 0, 1, 1], [], []>} : vector<64x32xbf16>, vector<32x96xbf16>, vector<64x96xf32> -> vector<64x96xf32>
    %c0_4 = arith.constant 0 : index
    %c0_5 = arith.constant 0 : index
    %c0_6 = arith.constant 0 : index
    %10 = vector.load %arg3[%c0_4, %c0_5, %c0_6] : memref<2x1x96xf32, #tpu.memory_space<vmem>>, vector<1x1x96xf32>
    %11 = vector.shape_cast %10 : vector<1x1x96xf32> to vector<1x96xf32>
    %12 = vector.broadcast %11 : vector<1x96xf32> to vector<64x96xf32>
    %13 = arith.addf %9, %12 : vector<64x96xf32>
    %c0_7 = arith.constant 0 : index
    %c0_8 = arith.constant 0 : index
    %c0_9 = arith.constant 0 : index
    %14 = vector.load %arg2[%c0_7, %c0_8, %c0_9] : memref<2x32x96xbf16, #tpu.memory_space<vmem>>, vector<1x32x96xbf16>
    %15 = vector.shape_cast %14 : vector<1x32x96xbf16> to vector<32x96xbf16>
    %c0_10 = arith.constant 0 : index
    %c0_11 = arith.constant 0 : index
    %c0_12 = arith.constant 0 : index
    %16 = vector.load %arg4[%c0_10, %c0_11, %c0_12] : memref<2x1x32xf32, #tpu.memory_space<vmem>>, vector<1x1x32xf32>
    %17 = vector.shape_cast %16 : vector<1x1x32xf32> to vector<1x32xf32>
    %c0_13 = arith.constant 0 : index
    %c0_14 = arith.constant 0 : index
    %c0_15 = arith.constant 0 : index
    %18 = vector.load %arg5[%c0_13, %c0_14, %c0_15] : memref<2x8x32xf32, #tpu.memory_space<vmem>>, vector<1x8x32xf32>
    %19 = vector.shape_cast %18 : vector<1x8x32xf32> to vector<8x32xf32>
    %20 = vector.extract_strided_slice %13 {offsets = [0, 0], sizes = [8, 96], strides = [1, 1]} : vector<64x96xf32> to vector<8x96xf32>
    %21 = arith.truncf %19 : vector<8x32xf32> to vector<8x32xbf16>
    %cst_16 = arith.constant dense<0.000000e+00> : vector<8x96xf32>
    %22 = tpu.matmul %21, %15, %cst_16 {dimension_numbers = #tpu.dot_dimension_numbers<[1], [0], [0], [1], [0, 0, 1, 1], [], []>} : vector<8x32xbf16>, vector<32x96xbf16>, vector<8x96xf32> -> vector<8x96xf32>
    %23 = vector.extract_strided_slice %20 {offsets = [0, 0], sizes = [8, 64], strides = [1, 1]} : vector<8x96xf32> to vector<8x64xf32>
    %24 = vector.extract_strided_slice %22 {offsets = [0, 0], sizes = [8, 64], strides = [1, 1]} : vector<8x96xf32> to vector<8x64xf32>
    %25 = arith.addf %23, %24 : vector<8x64xf32>
    %26 = arith.negf %25 : vector<8x64xf32>
    %27 = math.exp %26 : vector<8x64xf32>
    %cst_17 = arith.constant 1.000000e+00 : f32
    %28 = vector.broadcast %cst_17 : f32 to vector<8x64xf32>
    %29 = arith.addf %28, %27 : vector<8x64xf32>
    %30 = arith.divf %28, %29 : vector<8x64xf32>
    %31 = vector.extract_strided_slice %30 {offsets = [0, 0], sizes = [8, 32], strides = [1, 1]} : vector<8x64xf32> to vector<8x32xf32>
    %32 = vector.extract_strided_slice %30 {offsets = [0, 32], sizes = [8, 32], strides = [1, 1]} : vector<8x64xf32> to vector<8x32xf32>
    %33 = vector.extract_strided_slice %20 {offsets = [0, 64], sizes = [8, 32], strides = [1, 1]} : vector<8x96xf32> to vector<8x32xf32>
    %34 = vector.extract_strided_slice %22 {offsets = [0, 64], sizes = [8, 32], strides = [1, 1]} : vector<8x96xf32> to vector<8x32xf32>
    %35 = vector.broadcast %17 : vector<1x32xf32> to vector<8x32xf32>
    %36 = arith.addf %34, %35 : vector<8x32xf32>
    %37 = arith.mulf %31, %36 : vector<8x32xf32>
    %38 = arith.addf %33, %37 : vector<8x32xf32>
    %39 = math.tanh %38 : vector<8x32xf32>
    %cst_18 = arith.constant 1.000000e+00 : f32
    %40 = vector.broadcast %cst_18 : f32 to vector<8x32xf32>
    %41 = arith.subf %40, %32 : vector<8x32xf32>
    %42 = arith.mulf %41, %39 : vector<8x32xf32>
    %43 = arith.mulf %32, %19 : vector<8x32xf32>
    %44 = arith.addf %42, %43 : vector<8x32xf32>
    %45 = vector.extract_strided_slice %13 {offsets = [8, 0], sizes = [8, 96], strides = [1, 1]} : vector<64x96xf32> to vector<8x96xf32>
    %46 = arith.truncf %44 : vector<8x32xf32> to vector<8x32xbf16>
    %cst_19 = arith.constant dense<0.000000e+00> : vector<8x96xf32>
    %47 = tpu.matmul %46, %15, %cst_19 {dimension_numbers = #tpu.dot_dimension_numbers<[1], [0], [0], [1], [0, 0, 1, 1], [], []>} : vector<8x32xbf16>, vector<32x96xbf16>, vector<8x96xf32> -> vector<8x96xf32>
    %48 = vector.extract_strided_slice %45 {offsets = [0, 0], sizes = [8, 64], strides = [1, 1]} : vector<8x96xf32> to vector<8x64xf32>
    %49 = vector.extract_strided_slice %47 {offsets = [0, 0], sizes = [8, 64], strides = [1, 1]} : vector<8x96xf32> to vector<8x64xf32>
    %50 = arith.addf %48, %49 : vector<8x64xf32>
    %51 = arith.negf %50 : vector<8x64xf32>
    %52 = math.exp %51 : vector<8x64xf32>
    %cst_20 = arith.constant 1.000000e+00 : f32
    %53 = vector.broadcast %cst_20 : f32 to vector<8x64xf32>
    %54 = arith.addf %53, %52 : vector<8x64xf32>
    %55 = arith.divf %53, %54 : vector<8x64xf32>
    %56 = vector.extract_strided_slice %55 {offsets = [0, 0], sizes = [8, 32], strides = [1, 1]} : vector<8x64xf32> to vector<8x32xf32>
    %57 = vector.extract_strided_slice %55 {offsets = [0, 32], sizes = [8, 32], strides = [1, 1]} : vector<8x64xf32> to vector<8x32xf32>
    %58 = vector.extract_strided_slice %45 {offsets = [0, 64], sizes = [8, 32], strides = [1, 1]} : vector<8x96xf32> to vector<8x32xf32>
    %59 = vector.extract_strided_slice %47 {offsets = [0, 64], sizes = [8, 32], strides = [1, 1]} : vector<8x96xf32> to vector<8x32xf32>
    %60 = vector.broadcast %17 : vector<1x32xf32> to vector<8x32xf32>
    %61 = arith.addf %59, %60 : vector<8x32xf32>
    %62 = arith.mulf %56, %61 : vector<8x32xf32>
    %63 = arith.addf %58, %62 : vector<8x32xf32>
    %64 = math.tanh %63 : vector<8x32xf32>
    %cst_21 = arith.constant 1.000000e+00 : f32
    %65 = vector.broadcast %cst_21 : f32 to vector<8x32xf32>
    %66 = arith.subf %65, %57 : vector<8x32xf32>
    %67 = arith.mulf %66, %64 : vector<8x32xf32>
    %68 = arith.mulf %57, %44 : vector<8x32xf32>
    %69 = arith.addf %67, %68 : vector<8x32xf32>
    %70 = vector.extract_strided_slice %13 {offsets = [16, 0], sizes = [8, 96], strides = [1, 1]} : vector<64x96xf32> to vector<8x96xf32>
    %71 = arith.truncf %69 : vector<8x32xf32> to vector<8x32xbf16>
    %cst_22 = arith.constant dense<0.000000e+00> : vector<8x96xf32>
    %72 = tpu.matmul %71, %15, %cst_22 {dimension_numbers = #tpu.dot_dimension_numbers<[1], [0], [0], [1], [0, 0, 1, 1], [], []>} : vector<8x32xbf16>, vector<32x96xbf16>, vector<8x96xf32> -> vector<8x96xf32>
    %73 = vector.extract_strided_slice %70 {offsets = [0, 0], sizes = [8, 64], strides = [1, 1]} : vector<8x96xf32> to vector<8x64xf32>
    %74 = vector.extract_strided_slice %72 {offsets = [0, 0], sizes = [8, 64], strides = [1, 1]} : vector<8x96xf32> to vector<8x64xf32>
    %75 = arith.addf %73, %74 : vector<8x64xf32>
    %76 = arith.negf %75 : vector<8x64xf32>
    %77 = math.exp %76 : vector<8x64xf32>
    %cst_23 = arith.constant 1.000000e+00 : f32
    %78 = vector.broadcast %cst_23 : f32 to vector<8x64xf32>
    %79 = arith.addf %78, %77 : vector<8x64xf32>
    %80 = arith.divf %78, %79 : vector<8x64xf32>
    %81 = vector.extract_strided_slice %80 {offsets = [0, 0], sizes = [8, 32], strides = [1, 1]} : vector<8x64xf32> to vector<8x32xf32>
    %82 = vector.extract_strided_slice %80 {offsets = [0, 32], sizes = [8, 32], strides = [1, 1]} : vector<8x64xf32> to vector<8x32xf32>
    %83 = vector.extract_strided_slice %70 {offsets = [0, 64], sizes = [8, 32], strides = [1, 1]} : vector<8x96xf32> to vector<8x32xf32>
    %84 = vector.extract_strided_slice %72 {offsets = [0, 64], sizes = [8, 32], strides = [1, 1]} : vector<8x96xf32> to vector<8x32xf32>
    %85 = vector.broadcast %17 : vector<1x32xf32> to vector<8x32xf32>
    %86 = arith.addf %84, %85 : vector<8x32xf32>
    %87 = arith.mulf %81, %86 : vector<8x32xf32>
    %88 = arith.addf %83, %87 : vector<8x32xf32>
    %89 = math.tanh %88 : vector<8x32xf32>
    %cst_24 = arith.constant 1.000000e+00 : f32
    %90 = vector.broadcast %cst_24 : f32 to vector<8x32xf32>
    %91 = arith.subf %90, %82 : vector<8x32xf32>
    %92 = arith.mulf %91, %89 : vector<8x32xf32>
    %93 = arith.mulf %82, %69 : vector<8x32xf32>
    %94 = arith.addf %92, %93 : vector<8x32xf32>
    %95 = vector.extract_strided_slice %13 {offsets = [24, 0], sizes = [8, 96], strides = [1, 1]} : vector<64x96xf32> to vector<8x96xf32>
    %96 = arith.truncf %94 : vector<8x32xf32> to vector<8x32xbf16>
    %cst_25 = arith.constant dense<0.000000e+00> : vector<8x96xf32>
    %97 = tpu.matmul %96, %15, %cst_25 {dimension_numbers = #tpu.dot_dimension_numbers<[1], [0], [0], [1], [0, 0, 1, 1], [], []>} : vector<8x32xbf16>, vector<32x96xbf16>, vector<8x96xf32> -> vector<8x96xf32>
    %98 = vector.extract_strided_slice %95 {offsets = [0, 0], sizes = [8, 64], strides = [1, 1]} : vector<8x96xf32> to vector<8x64xf32>
    %99 = vector.extract_strided_slice %97 {offsets = [0, 0], sizes = [8, 64], strides = [1, 1]} : vector<8x96xf32> to vector<8x64xf32>
    %100 = arith.addf %98, %99 : vector<8x64xf32>
    %101 = arith.negf %100 : vector<8x64xf32>
    %102 = math.exp %101 : vector<8x64xf32>
    %cst_26 = arith.constant 1.000000e+00 : f32
    %103 = vector.broadcast %cst_26 : f32 to vector<8x64xf32>
    %104 = arith.addf %103, %102 : vector<8x64xf32>
    %105 = arith.divf %103, %104 : vector<8x64xf32>
    %106 = vector.extract_strided_slice %105 {offsets = [0, 0], sizes = [8, 32], strides = [1, 1]} : vector<8x64xf32> to vector<8x32xf32>
    %107 = vector.extract_strided_slice %105 {offsets = [0, 32], sizes = [8, 32], strides = [1, 1]} : vector<8x64xf32> to vector<8x32xf32>
    %108 = vector.extract_strided_slice %95 {offsets = [0, 64], sizes = [8, 32], strides = [1, 1]} : vector<8x96xf32> to vector<8x32xf32>
    %109 = vector.extract_strided_slice %97 {offsets = [0, 64], sizes = [8, 32], strides = [1, 1]} : vector<8x96xf32> to vector<8x32xf32>
    %110 = vector.broadcast %17 : vector<1x32xf32> to vector<8x32xf32>
    %111 = arith.addf %109, %110 : vector<8x32xf32>
    %112 = arith.mulf %106, %111 : vector<8x32xf32>
    %113 = arith.addf %108, %112 : vector<8x32xf32>
    %114 = math.tanh %113 : vector<8x32xf32>
    %cst_27 = arith.constant 1.000000e+00 : f32
    %115 = vector.broadcast %cst_27 : f32 to vector<8x32xf32>
    %116 = arith.subf %115, %107 : vector<8x32xf32>
    %117 = arith.mulf %116, %114 : vector<8x32xf32>
    %118 = arith.mulf %107, %94 : vector<8x32xf32>
    %119 = arith.addf %117, %118 : vector<8x32xf32>
    %120 = vector.extract_strided_slice %13 {offsets = [32, 0], sizes = [8, 96], strides = [1, 1]} : vector<64x96xf32> to vector<8x96xf32>
    %121 = arith.truncf %119 : vector<8x32xf32> to vector<8x32xbf16>
    %cst_28 = arith.constant dense<0.000000e+00> : vector<8x96xf32>
    %122 = tpu.matmul %121, %15, %cst_28 {dimension_numbers = #tpu.dot_dimension_numbers<[1], [0], [0], [1], [0, 0, 1, 1], [], []>} : vector<8x32xbf16>, vector<32x96xbf16>, vector<8x96xf32> -> vector<8x96xf32>
    %123 = vector.extract_strided_slice %120 {offsets = [0, 0], sizes = [8, 64], strides = [1, 1]} : vector<8x96xf32> to vector<8x64xf32>
    %124 = vector.extract_strided_slice %122 {offsets = [0, 0], sizes = [8, 64], strides = [1, 1]} : vector<8x96xf32> to vector<8x64xf32>
    %125 = arith.addf %123, %124 : vector<8x64xf32>
    %126 = arith.negf %125 : vector<8x64xf32>
    %127 = math.exp %126 : vector<8x64xf32>
    %cst_29 = arith.constant 1.000000e+00 : f32
    %128 = vector.broadcast %cst_29 : f32 to vector<8x64xf32>
    %129 = arith.addf %128, %127 : vector<8x64xf32>
    %130 = arith.divf %128, %129 : vector<8x64xf32>
    %131 = vector.extract_strided_slice %130 {offsets = [0, 0], sizes = [8, 32], strides = [1, 1]} : vector<8x64xf32> to vector<8x32xf32>
    %132 = vector.extract_strided_slice %130 {offsets = [0, 32], sizes = [8, 32], strides = [1, 1]} : vector<8x64xf32> to vector<8x32xf32>
    %133 = vector.extract_strided_slice %120 {offsets = [0, 64], sizes = [8, 32], strides = [1, 1]} : vector<8x96xf32> to vector<8x32xf32>
    %134 = vector.extract_strided_slice %122 {offsets = [0, 64], sizes = [8, 32], strides = [1, 1]} : vector<8x96xf32> to vector<8x32xf32>
    %135 = vector.broadcast %17 : vector<1x32xf32> to vector<8x32xf32>
    %136 = arith.addf %134, %135 : vector<8x32xf32>
    %137 = arith.mulf %131, %136 : vector<8x32xf32>
    %138 = arith.addf %133, %137 : vector<8x32xf32>
    %139 = math.tanh %138 : vector<8x32xf32>
    %cst_30 = arith.constant 1.000000e+00 : f32
    %140 = vector.broadcast %cst_30 : f32 to vector<8x32xf32>
    %141 = arith.subf %140, %132 : vector<8x32xf32>
    %142 = arith.mulf %141, %139 : vector<8x32xf32>
    %143 = arith.mulf %132, %119 : vector<8x32xf32>
    %144 = arith.addf %142, %143 : vector<8x32xf32>
    %145 = vector.extract_strided_slice %13 {offsets = [40, 0], sizes = [8, 96], strides = [1, 1]} : vector<64x96xf32> to vector<8x96xf32>
    %146 = arith.truncf %144 : vector<8x32xf32> to vector<8x32xbf16>
    %cst_31 = arith.constant dense<0.000000e+00> : vector<8x96xf32>
    %147 = tpu.matmul %146, %15, %cst_31 {dimension_numbers = #tpu.dot_dimension_numbers<[1], [0], [0], [1], [0, 0, 1, 1], [], []>} : vector<8x32xbf16>, vector<32x96xbf16>, vector<8x96xf32> -> vector<8x96xf32>
    %148 = vector.extract_strided_slice %145 {offsets = [0, 0], sizes = [8, 64], strides = [1, 1]} : vector<8x96xf32> to vector<8x64xf32>
    %149 = vector.extract_strided_slice %147 {offsets = [0, 0], sizes = [8, 64], strides = [1, 1]} : vector<8x96xf32> to vector<8x64xf32>
    %150 = arith.addf %148, %149 : vector<8x64xf32>
    %151 = arith.negf %150 : vector<8x64xf32>
    %152 = math.exp %151 : vector<8x64xf32>
    %cst_32 = arith.constant 1.000000e+00 : f32
    %153 = vector.broadcast %cst_32 : f32 to vector<8x64xf32>
    %154 = arith.addf %153, %152 : vector<8x64xf32>
    %155 = arith.divf %153, %154 : vector<8x64xf32>
    %156 = vector.extract_strided_slice %155 {offsets = [0, 0], sizes = [8, 32], strides = [1, 1]} : vector<8x64xf32> to vector<8x32xf32>
    %157 = vector.extract_strided_slice %155 {offsets = [0, 32], sizes = [8, 32], strides = [1, 1]} : vector<8x64xf32> to vector<8x32xf32>
    %158 = vector.extract_strided_slice %145 {offsets = [0, 64], sizes = [8, 32], strides = [1, 1]} : vector<8x96xf32> to vector<8x32xf32>
    %159 = vector.extract_strided_slice %147 {offsets = [0, 64], sizes = [8, 32], strides = [1, 1]} : vector<8x96xf32> to vector<8x32xf32>
    %160 = vector.broadcast %17 : vector<1x32xf32> to vector<8x32xf32>
    %161 = arith.addf %159, %160 : vector<8x32xf32>
    %162 = arith.mulf %156, %161 : vector<8x32xf32>
    %163 = arith.addf %158, %162 : vector<8x32xf32>
    %164 = math.tanh %163 : vector<8x32xf32>
    %cst_33 = arith.constant 1.000000e+00 : f32
    %165 = vector.broadcast %cst_33 : f32 to vector<8x32xf32>
    %166 = arith.subf %165, %157 : vector<8x32xf32>
    %167 = arith.mulf %166, %164 : vector<8x32xf32>
    %168 = arith.mulf %157, %144 : vector<8x32xf32>
    %169 = arith.addf %167, %168 : vector<8x32xf32>
    %170 = vector.extract_strided_slice %13 {offsets = [48, 0], sizes = [8, 96], strides = [1, 1]} : vector<64x96xf32> to vector<8x96xf32>
    %171 = arith.truncf %169 : vector<8x32xf32> to vector<8x32xbf16>
    %cst_34 = arith.constant dense<0.000000e+00> : vector<8x96xf32>
    %172 = tpu.matmul %171, %15, %cst_34 {dimension_numbers = #tpu.dot_dimension_numbers<[1], [0], [0], [1], [0, 0, 1, 1], [], []>} : vector<8x32xbf16>, vector<32x96xbf16>, vector<8x96xf32> -> vector<8x96xf32>
    %173 = vector.extract_strided_slice %170 {offsets = [0, 0], sizes = [8, 64], strides = [1, 1]} : vector<8x96xf32> to vector<8x64xf32>
    %174 = vector.extract_strided_slice %172 {offsets = [0, 0], sizes = [8, 64], strides = [1, 1]} : vector<8x96xf32> to vector<8x64xf32>
    %175 = arith.addf %173, %174 : vector<8x64xf32>
    %176 = arith.negf %175 : vector<8x64xf32>
    %177 = math.exp %176 : vector<8x64xf32>
    %cst_35 = arith.constant 1.000000e+00 : f32
    %178 = vector.broadcast %cst_35 : f32 to vector<8x64xf32>
    %179 = arith.addf %178, %177 : vector<8x64xf32>
    %180 = arith.divf %178, %179 : vector<8x64xf32>
    %181 = vector.extract_strided_slice %180 {offsets = [0, 0], sizes = [8, 32], strides = [1, 1]} : vector<8x64xf32> to vector<8x32xf32>
    %182 = vector.extract_strided_slice %180 {offsets = [0, 32], sizes = [8, 32], strides = [1, 1]} : vector<8x64xf32> to vector<8x32xf32>
    %183 = vector.extract_strided_slice %170 {offsets = [0, 64], sizes = [8, 32], strides = [1, 1]} : vector<8x96xf32> to vector<8x32xf32>
    %184 = vector.extract_strided_slice %172 {offsets = [0, 64], sizes = [8, 32], strides = [1, 1]} : vector<8x96xf32> to vector<8x32xf32>
    %185 = vector.broadcast %17 : vector<1x32xf32> to vector<8x32xf32>
    %186 = arith.addf %184, %185 : vector<8x32xf32>
    %187 = arith.mulf %181, %186 : vector<8x32xf32>
    %188 = arith.addf %183, %187 : vector<8x32xf32>
    %189 = math.tanh %188 : vector<8x32xf32>
    %cst_36 = arith.constant 1.000000e+00 : f32
    %190 = vector.broadcast %cst_36 : f32 to vector<8x32xf32>
    %191 = arith.subf %190, %182 : vector<8x32xf32>
    %192 = arith.mulf %191, %189 : vector<8x32xf32>
    %193 = arith.mulf %182, %169 : vector<8x32xf32>
    %194 = arith.addf %192, %193 : vector<8x32xf32>
    %195 = vector.extract_strided_slice %13 {offsets = [56, 0], sizes = [8, 96], strides = [1, 1]} : vector<64x96xf32> to vector<8x96xf32>
    %196 = arith.truncf %194 : vector<8x32xf32> to vector<8x32xbf16>
    %cst_37 = arith.constant dense<0.000000e+00> : vector<8x96xf32>
    %197 = tpu.matmul %196, %15, %cst_37 {dimension_numbers = #tpu.dot_dimension_numbers<[1], [0], [0], [1], [0, 0, 1, 1], [], []>} : vector<8x32xbf16>, vector<32x96xbf16>, vector<8x96xf32> -> vector<8x96xf32>
    %198 = vector.extract_strided_slice %195 {offsets = [0, 0], sizes = [8, 64], strides = [1, 1]} : vector<8x96xf32> to vector<8x64xf32>
    %199 = vector.extract_strided_slice %197 {offsets = [0, 0], sizes = [8, 64], strides = [1, 1]} : vector<8x96xf32> to vector<8x64xf32>
    %200 = arith.addf %198, %199 : vector<8x64xf32>
    %201 = arith.negf %200 : vector<8x64xf32>
    %202 = math.exp %201 : vector<8x64xf32>
    %cst_38 = arith.constant 1.000000e+00 : f32
    %203 = vector.broadcast %cst_38 : f32 to vector<8x64xf32>
    %204 = arith.addf %203, %202 : vector<8x64xf32>
    %205 = arith.divf %203, %204 : vector<8x64xf32>
    %206 = vector.extract_strided_slice %205 {offsets = [0, 0], sizes = [8, 32], strides = [1, 1]} : vector<8x64xf32> to vector<8x32xf32>
    %207 = vector.extract_strided_slice %205 {offsets = [0, 32], sizes = [8, 32], strides = [1, 1]} : vector<8x64xf32> to vector<8x32xf32>
    %208 = vector.extract_strided_slice %195 {offsets = [0, 64], sizes = [8, 32], strides = [1, 1]} : vector<8x96xf32> to vector<8x32xf32>
    %209 = vector.extract_strided_slice %197 {offsets = [0, 64], sizes = [8, 32], strides = [1, 1]} : vector<8x96xf32> to vector<8x32xf32>
    %210 = vector.broadcast %17 : vector<1x32xf32> to vector<8x32xf32>
    %211 = arith.addf %209, %210 : vector<8x32xf32>
    %212 = arith.mulf %206, %211 : vector<8x32xf32>
    %213 = arith.addf %208, %212 : vector<8x32xf32>
    %214 = math.tanh %213 : vector<8x32xf32>
    %cst_39 = arith.constant 1.000000e+00 : f32
    %215 = vector.broadcast %cst_39 : f32 to vector<8x32xf32>
    %216 = arith.subf %215, %207 : vector<8x32xf32>
    %217 = arith.mulf %216, %214 : vector<8x32xf32>
    %218 = arith.mulf %207, %194 : vector<8x32xf32>
    %219 = arith.addf %217, %218 : vector<8x32xf32>
    %220 = vector.extract_strided_slice %6 {offsets = [56, 0], sizes = [8, 32], strides = [1, 1]} : vector<64x32xbf16> to vector<8x32xbf16>
    %c1 = arith.constant 1 : index
    %c0_40 = arith.constant 0 : index
    %c0_41 = arith.constant 0 : index
    %221 = vector.load %arg1[%c1, %c0_40, %c0_41] : memref<2x32x96xbf16, #tpu.memory_space<vmem>>, vector<1x32x96xbf16>
    %222 = vector.shape_cast %221 : vector<1x32x96xbf16> to vector<32x96xbf16>
    %cst_42 = arith.constant dense<0.000000e+00> : vector<8x96xf32>
    %223 = tpu.matmul %220, %222, %cst_42 {dimension_numbers = #tpu.dot_dimension_numbers<[1], [0], [0], [1], [0, 0, 1, 1], [], []>} : vector<8x32xbf16>, vector<32x96xbf16>, vector<8x96xf32> -> vector<8x96xf32>
    %c1_43 = arith.constant 1 : index
    %c0_44 = arith.constant 0 : index
    %c0_45 = arith.constant 0 : index
    %224 = vector.load %arg3[%c1_43, %c0_44, %c0_45] : memref<2x1x96xf32, #tpu.memory_space<vmem>>, vector<1x1x96xf32>
    %225 = vector.shape_cast %224 : vector<1x1x96xf32> to vector<1x96xf32>
    %226 = vector.broadcast %225 : vector<1x96xf32> to vector<8x96xf32>
    %227 = arith.addf %223, %226 : vector<8x96xf32>
    %c1_46 = arith.constant 1 : index
    %c0_47 = arith.constant 0 : index
    %c0_48 = arith.constant 0 : index
    %228 = vector.load %arg5[%c1_46, %c0_47, %c0_48] : memref<2x8x32xf32, #tpu.memory_space<vmem>>, vector<1x8x32xf32>
    %229 = vector.shape_cast %228 : vector<1x8x32xf32> to vector<8x32xf32>
    %230 = arith.truncf %229 : vector<8x32xf32> to vector<8x32xbf16>
    %c1_49 = arith.constant 1 : index
    %c0_50 = arith.constant 0 : index
    %c0_51 = arith.constant 0 : index
    %231 = vector.load %arg2[%c1_49, %c0_50, %c0_51] : memref<2x32x96xbf16, #tpu.memory_space<vmem>>, vector<1x32x96xbf16>
    %232 = vector.shape_cast %231 : vector<1x32x96xbf16> to vector<32x96xbf16>
    %cst_52 = arith.constant dense<0.000000e+00> : vector<8x96xf32>
    %233 = tpu.matmul %230, %232, %cst_52 {dimension_numbers = #tpu.dot_dimension_numbers<[1], [0], [0], [1], [0, 0, 1, 1], [], []>} : vector<8x32xbf16>, vector<32x96xbf16>, vector<8x96xf32> -> vector<8x96xf32>
    %c1_53 = arith.constant 1 : index
    %c0_54 = arith.constant 0 : index
    %c0_55 = arith.constant 0 : index
    %234 = vector.load %arg4[%c1_53, %c0_54, %c0_55] : memref<2x1x32xf32, #tpu.memory_space<vmem>>, vector<1x1x32xf32>
    %235 = vector.shape_cast %234 : vector<1x1x32xf32> to vector<1x32xf32>
    %236 = vector.extract_strided_slice %227 {offsets = [0, 0], sizes = [8, 64], strides = [1, 1]} : vector<8x96xf32> to vector<8x64xf32>
    %237 = vector.extract_strided_slice %233 {offsets = [0, 0], sizes = [8, 64], strides = [1, 1]} : vector<8x96xf32> to vector<8x64xf32>
    %238 = arith.addf %236, %237 : vector<8x64xf32>
    %239 = arith.negf %238 : vector<8x64xf32>
    %240 = math.exp %239 : vector<8x64xf32>
    %cst_56 = arith.constant 1.000000e+00 : f32
    %241 = vector.broadcast %cst_56 : f32 to vector<8x64xf32>
    %242 = arith.addf %241, %240 : vector<8x64xf32>
    %243 = arith.divf %241, %242 : vector<8x64xf32>
    %244 = vector.extract_strided_slice %243 {offsets = [0, 0], sizes = [8, 32], strides = [1, 1]} : vector<8x64xf32> to vector<8x32xf32>
    %245 = vector.extract_strided_slice %243 {offsets = [0, 32], sizes = [8, 32], strides = [1, 1]} : vector<8x64xf32> to vector<8x32xf32>
    %246 = vector.extract_strided_slice %227 {offsets = [0, 64], sizes = [8, 32], strides = [1, 1]} : vector<8x96xf32> to vector<8x32xf32>
    %247 = vector.extract_strided_slice %233 {offsets = [0, 64], sizes = [8, 32], strides = [1, 1]} : vector<8x96xf32> to vector<8x32xf32>
    %248 = vector.broadcast %235 : vector<1x32xf32> to vector<8x32xf32>
    %249 = arith.addf %247, %248 : vector<8x32xf32>
    %250 = arith.mulf %244, %249 : vector<8x32xf32>
    %251 = arith.addf %246, %250 : vector<8x32xf32>
    %252 = math.tanh %251 : vector<8x32xf32>
    %cst_57 = arith.constant 1.000000e+00 : f32
    %253 = vector.broadcast %cst_57 : f32 to vector<8x32xf32>
    %254 = arith.subf %253, %245 : vector<8x32xf32>
    %255 = arith.mulf %254, %252 : vector<8x32xf32>
    %256 = arith.mulf %245, %229 : vector<8x32xf32>
    %257 = arith.addf %255, %256 : vector<8x32xf32>
    %258 = tpu.concatenate %219, %257 in 1 : vector<8x32xf32>, vector<8x32xf32> -> vector<8x64xf32>
    %259 = arith.truncf %258 : vector<8x64xf32> to vector<8x64xbf16>
    %c0_58 = arith.constant 0 : index
    %c0_59 = arith.constant 0 : index
    %260 = vector.load %arg6[%c0_58, %c0_59] : memref<64x8xbf16, #tpu.memory_space<vmem>>, vector<64x8xbf16>
    %cst_60 = arith.constant dense<0.000000e+00> : vector<8x8xf32>
    %261 = tpu.matmul %259, %260, %cst_60 {dimension_numbers = #tpu.dot_dimension_numbers<[1], [0], [0], [1], [0, 0, 1, 1], [], []>} : vector<8x64xbf16>, vector<64x8xbf16>, vector<8x8xf32> -> vector<8x8xf32>
    %c0_61 = arith.constant 0 : index
    %c0_62 = arith.constant 0 : index
    %262 = vector.load %arg7[%c0_61, %c0_62] : memref<1x8xf32, #tpu.memory_space<vmem>>, vector<1x8xf32>
    %263 = vector.broadcast %262 : vector<1x8xf32> to vector<8x8xf32>
    %264 = arith.addf %261, %263 : vector<8x8xf32>
    %c0_63 = arith.constant 0 : index
    %c0_64 = arith.constant 0 : index
    %265 = vector.load %arg8[%c0_63, %c0_64] : memref<8x8xf32, #tpu.memory_space<vmem>>, vector<8x8xf32>
    tpu.vector_store %arg8[%c0_63, %c0_64], %264 {strides = array<i32>} : memref<8x8xf32, #tpu.memory_space<vmem>>, vector<8x8xf32>,
    return
  }
}

</mosaic_0001>

<llo_original>
// kernel: tpu_custom_call.1
$region0: #{tpu_custom_call.1}
  #allocation0 [shape = 'u32[]', space=smem, size = 0x4, offset = 0x4, fixed_abs, tag = 'smem constant byte address 0x4 - core index']
  #allocation1 [shape = 'u32[72,128]{1,0:T(1,128)}', space=vmem, size = 0x9000, scoped, tag = 'internal scratch']
  %s0 = inlined_call_operand.vmem [shape: s32[64,1], index: 0, kind: input, shape index: {}]
  %s1 = inlined_call_operand.vmem [shape: bf16[2,32,96], index: 1, kind: input, shape index: {}]
  %s2 = inlined_call_operand.vmem [shape: bf16[2,32,96], index: 2, kind: input, shape index: {}]
  %s3 = inlined_call_operand.vmem [shape: f32[2,1,96], index: 3, kind: input, shape index: {}]
  %s4 = inlined_call_operand.vmem [shape: f32[2,1,32], index: 4, kind: input, shape index: {}]
  %s5 = inlined_call_operand.vmem [shape: f32[2,8,32], index: 5, kind: input, shape index: {}]
  %s6 = inlined_call_operand.vmem [shape: bf16[64,8], index: 6, kind: input, shape index: {}]
  %s7 = inlined_call_operand.vmem [shape: f32[1,8], index: 7, kind: input, shape index: {}]
  %s8 = inlined_call_operand.hbm [shape: f32[8,8], index: 8, kind: output, shape index: {}]
  %s9 = sld [smem:[#allocation0]]
  $region42: #{tpu_custom_call.1} parent=0
    _
  %s11 = ssub.s32 1, %s9
  %s12 = scalar_select 0, %s11, %s9
  $region1: #{tpu_custom_call.1} parent=0
    #allocation2 [shape = 'u8[4096]{0}', space=vmem, size = 0x1000, scoped, tag = 'output window, operand 0, single buffered']
    #allocation3 [shape = 's32[1]{0}', space=sflag, size = 0x4, scoped, tag = 'scoped memory for tpu_custom_call.1']
    %13 = vsyncpa [#allocation3], 0
    // Predicated region
    $region2: #{tpu_custom_call.1} parent=1 // pred_check
      _
    $region3: #{tpu_custom_call.1} parent=1 // pred_check_branch
      %15 = sbr.rel (0) target = $region5
    $region4: #{tpu_custom_call.1} parent=1 // pred_region
      _
    $region5: #{tpu_custom_call.1} parent=1 // pred_fallthru
      _
    // Predicated region
    $region6: #{tpu_custom_call.1} parent=1 // pred_check
      _
    $region7: #{tpu_custom_call.1} parent=1 // pred_check_branch
      %17 = sbr.rel (0) target = $region9
    $region8: #{tpu_custom_call.1} parent=1 // pred_region
      _
    $region9: #{tpu_custom_call.1} parent=1 // pred_fallthru
      _
    // Predicated region
    $region10: #{tpu_custom_call.1} parent=1 // pred_check
      _
    $region11: #{tpu_custom_call.1} parent=1 // pred_check_branch
      %19 = sbr.rel (0) target = $region13
    $region12: #{tpu_custom_call.1} parent=1 // pred_region
      _
    $region13: #{tpu_custom_call.1} parent=1 // pred_fallthru
      _
    // Predicated region
    $region14: #{tpu_custom_call.1} parent=1 // pred_check
      _
    $region15: #{tpu_custom_call.1} parent=1 // pred_check_branch
      %21 = sbr.rel (0) target = $region17
    $region16: #{tpu_custom_call.1} parent=1 // pred_region
      _
    $region17: #{tpu_custom_call.1} parent=1 // pred_fallthru
      _
    // Predicated region
    $region18: #{tpu_custom_call.1} parent=1 // pred_check
      _
    $region19: #{tpu_custom_call.1} parent=1 // pred_check_branch
      %23 = sbr.rel (0) target = $region21
    $region20: #{tpu_custom_call.1} parent=1 // pred_region
      _
    $region21: #{tpu_custom_call.1} parent=1 // pred_fallthru
      _
    // Predicated region
    $region22: #{tpu_custom_call.1} parent=1 // pred_check
      _
    $region23: #{tpu_custom_call.1} parent=1 // pred_check_branch
      %25 = sbr.rel (0) target = $region25
    $region24: #{tpu_custom_call.1} parent=1 // pred_region
      _
    $region25: #{tpu_custom_call.1} parent=1 // pred_fallthru
      _
    // Predicated region
    $region26: #{tpu_custom_call.1} parent=1 // pred_check
      _
    $region27: #{tpu_custom_call.1} parent=1 // pred_check_branch
      %27 = sbr.rel (0) target = $region29
    $region28: #{tpu_custom_call.1} parent=1 // pred_region
      _
    $region29: #{tpu_custom_call.1} parent=1 // pred_fallthru
      _
    // Predicated region
    $region30: #{tpu_custom_call.1} parent=1 // pred_check
      _
    $region31: #{tpu_custom_call.1} parent=1 // pred_check_branch
      %29 = sbr.rel (0) target = $region33
    $region32: #{tpu_custom_call.1} parent=1 // pred_region
      _
    $region33: #{tpu_custom_call.1} parent=1 // pred_fallthru
      _
    %v31 = vlaneseq
    %v32 = vand.u32 %v31, 127
    %v33 = vld [vmem:[%s0] sm:$0xff]
    %v34 = vld [vmem:[%s0 + $0x8] sm:$0xff]
    %v35 = vld [vmem:[%s0 + $0x10] sm:$0xff]
    %v36 = vld [vmem:[%s0 + $0x18] sm:$0xff]
    %v37 = vld [vmem:[%s0 + $0x20] sm:$0xff]
    %v38 = vld [vmem:[%s0 + $0x28] sm:$0xff]
    %v39 = vld [vmem:[%s0 + $0x30] sm:$0xff]
    %v40 = vld [vmem:[%s0 + $0x38] sm:$0xff]
    %41 = vset.pattern.permute.xlu0 0
    %42 = vperm.xlu0 %41, %v33
    %v43 = vpop.permute.xlu0 %42
    %44 = vset.pattern.permute.xlu0 0
    %45 = vperm.xlu0 %44, %v34
    %v46 = vpop.permute.xlu0 %45
    %47 = vset.pattern.permute.xlu0 0
    %48 = vperm.xlu0 %47, %v35
    %v49 = vpop.permute.xlu0 %48
    %50 = vset.pattern.permute.xlu0 0
    %51 = vperm.xlu0 %50, %v36
    %v52 = vpop.permute.xlu0 %51
    %53 = vset.pattern.permute.xlu0 0
    %54 = vperm.xlu0 %53, %v37
    %v55 = vpop.permute.xlu0 %54
    %56 = vset.pattern.permute.xlu0 0
    %57 = vperm.xlu0 %56, %v38
    %v58 = vpop.permute.xlu0 %57
    %59 = vset.pattern.permute.xlu0 0
    %60 = vperm.xlu0 %59, %v39
    %v61 = vpop.permute.xlu0 %60
    %62 = vset.pattern.permute.xlu0 0
    %63 = vperm.xlu0 %62, %v40
    %v64 = vpop.permute.xlu0 %63
    %vm65 = vcmp.eq.s32.totalorder %v32, %v43
    %vm66 = vcmp.eq.s32.totalorder %v32, %v46
    %vm67 = vcmp.eq.s32.totalorder %v32, %v49
    %vm68 = vcmp.eq.s32.totalorder %v32, %v52
    %vm69 = vcmp.eq.s32.totalorder %v32, %v55
    %vm70 = vcmp.eq.s32.totalorder %v32, %v58
    %vm71 = vcmp.eq.s32.totalorder %v32, %v61
    %vm72 = vcmp.eq.s32.totalorder %v32, %v64
    %v73 = vsel %vm65, 1, 0
    %v74 = vsel %vm66, 1, 0
    %v75 = vsel %vm67, 1, 0
    %v76 = vsel %vm68, 1, 0
    %v77 = vsel %vm69, 1, 0
    %v78 = vsel %vm70, 1, 0
    %v79 = vsel %vm71, 1, 0
    %v80 = vsel %vm72, 1, 0
    %v81 = vcvt.s32.f32 %v73
    %v82 = vcvt.s32.f32 %v74
    %v83 = vcvt.s32.f32 %v75
    %v84 = vcvt.s32.f32 %v76
    %v85 = vcvt.s32.f32 %v77
    %v86 = vcvt.s32.f32 %v78
    %v87 = vcvt.s32.f32 %v79
    %v88 = vcvt.s32.f32 %v80
    %v89 = vpack.c.bf16 %v81, %v81
    %v90 = vpack.c.bf16 %v82, %v82
    %v91 = vpack.c.bf16 %v83, %v83
    %v92 = vpack.c.bf16 %v84, %v84
    %v93 = vpack.c.bf16 %v85, %v85
    %v94 = vpack.c.bf16 %v86, %v86
    %v95 = vpack.c.bf16 %v87, %v87
    %v96 = vpack.c.bf16 %v88, %v88
    %v97 = vld [vmem:[%s1] sm:$0xf]
    %v98 = vld [vmem:[%s1 + $0x4] sm:$0xf]
    %v99 = vld [vmem:[%s1 + $0x8] sm:$0xf]
    %v100 = vld [vmem:[%s1 + $0xc] sm:$0xf]
    %v101 = vld [vmem:[%s3] sm:$0x1]
    %v103 = vperm.slane %v101, 0
    %v113 = vunpack.c.l.b16 %v89
    %v114 = vunpack.c.l.b16 %v90
    %v115 = vunpack.c.l.b16 %v91
    %v116 = vunpack.c.l.b16 %v92
    %v117 = vunpack.c.l.b16 %v93
    %v118 = vunpack.c.l.b16 %v94
    %v119 = vunpack.c.l.b16 %v95
    %v120 = vunpack.c.l.b16 %v96
    %v121 = vpack.c.b16 %v114, %v113
    %v122 = vpack.c.b16 %v116, %v115
    %v123 = vpack.c.b16 %v118, %v117
    %v124 = vpack.c.b16 %v120, %v119
    %v129 = vunpack.c.l.b16 %v97
    %v130 = vunpack.c.l.b16 %v98
    %v131 = vunpack.c.l.b16 %v99
    %v132 = vunpack.c.l.b16 %v100
    %v133 = vpack.c.b16 %v130, %v129
    %v134 = vpack.c.b16 %v132, %v131
    %vm137 = vcmask 261120
    %v139 = vsel %vm137, %v121, 0
    %v142 = vsel %vm137, %v122, 0
    %v145 = vsel %vm137, %v123, 0
    %v148 = vsel %vm137, %v124, 0
    %150 = vmatpush.bf16.msra.mxu0 0
    %151 = vmatpush.bf16.msra.mxu0 0
    %152 = vmatpush.bf16.msra.mxu0 0
    %153 = vmatpush.bf16.msra.mxu0 0
    %154 = vmatpush.bf16.msra.mxu0 0
    %155 = vmatpush.bf16.msra.mxu0 0
    %156 = vmatpush.bf16.msra.mxu0 %v134
    %157 = vmatpush.bf16.msra.mxu0 %v133
    %158 = vmatmul.bf16.gmra.mxu0 %v139
    %v159 = vpop.f32.mrf.mxu0
    %v160 = vadd.f32 %v103, %v159
    %v161 = vpop.f32.mrf.mxu0
    %v162 = vadd.f32 %v103, %v161
    %163 = vmatmul.bf16.gmra.mxu0 %v142
    %v164 = vpop.f32.mrf.mxu0
    %v165 = vadd.f32 %v103, %v164
    %v166 = vpop.f32.mrf.mxu0
    %v167 = vadd.f32 %v103, %v166
    %168 = vmatmul.bf16.gmra.mxu0 %v145
    %v169 = vpop.f32.mrf.mxu0
    %v170 = vadd.f32 %v103, %v169
    %v171 = vpop.f32.mrf.mxu0
    %v172 = vadd.f32 %v103, %v171
    %173 = vmatmul.bf16.gmra.mxu0 %v148
    %v174 = vpop.f32.mrf.mxu0
    %v175 = vadd.f32 %v103, %v174
    %v176 = vpop.f32.mrf.mxu0
    %v177 = vadd.f32 %v103, %v176
    %178 = vdwg.mxu0
    %v179 = vld [vmem:[%s2] sm:$0xf]
    %v180 = vld [vmem:[%s2 + $0x4] sm:$0xf]
    %v181 = vld [vmem:[%s2 + $0x8] sm:$0xf]
    %v182 = vld [vmem:[%s2 + $0xc] sm:$0xf]
    %v183 = vld [vmem:[%s4] sm:$0x1]
    %v184 = vld [vmem:[%s5] sm:$0xff]
    %v185 = vpack.c.bf16 %v184, %v184
    %v190 = vunpack.c.l.b16 %v179
    %v191 = vunpack.c.l.b16 %v180
    %v192 = vunpack.c.l.b16 %v181
    %v193 = vunpack.c.l.b16 %v182
    %v194 = vpack.c.b16 %v191, %v190
    %v195 = vpack.c.b16 %v193, %v192
    %v199 = vsel %vm137, %v185, 0
    %201 = vmatpush.bf16.msra.mxu0 0
    %202 = vmatpush.bf16.msra.mxu0 0
    %203 = vmatpush.bf16.msra.mxu0 0
    %204 = vmatpush.bf16.msra.mxu0 0
    %205 = vmatpush.bf16.msra.mxu0 0
    %206 = vmatpush.bf16.msra.mxu0 0
    %207 = vmatpush.bf16.msra.mxu0 %v195
    %208 = vmatpush.bf16.msra.mxu0 %v194
    %209 = vmatmul.bf16.gmra.mxu0 %v199
    %v210 = vpop.f32.mrf.mxu0
    %v211 = vadd.f32 0.0, %v210
    %v212 = vpop.f32.mrf.mxu0
    %213 = vdwg.mxu0
    %v214 = vadd.f32 %v160, %v211
    %v215 = vxor.u32 %v214, 2147483648
    %v216 = vmul.f32 %v215, 1.442695
    %v217 = vpow.pop %v216
    %v218 = vadd.f32 %v217, 1.0
    %v219 = vrcp.pop %v218
    %v220 = vmul.f32 %v218, %v219
    %v221 = vsub.f32 1.0, %v220
    %v222 = vmul.f32 %v219, %v221
    %v223 = vadd.f32 %v219, %v222
    %vm224 = vweird.f32 %v218
    %vm225 = vweird.f32 %v219
    %vm226 = vmor %vm224, %vm225
    %v227 = vsel %vm226, %v219, %v223
    %v228 = vand.u32 2147483647, %v218
    %vm229 = vcmp.eq.f32.partialorder %v228, 8.507059e+37
    %v230 = vand.u32 %v218, 2147483648
    %v231 = vor.u32 1.1754944e-38, %v230
    %v232 = vsel %vm229, %v231, %v227
    %v233 = vmul.f32 1.0, %v232
    %v235 = vperm.slane %v183, 0
    %236 = vrot.lane.b32.xlu0 %v235, 64
    %v237 = vpop.permute.xlu0 %236
    %v239 = vadd.f32 %v211, %v237
    %241 = vrot.lane.b32.xlu0 %v239, 64
    %v242 = vpop.permute.xlu0 %241
    %v244 = vmul.f32 %v233, %v242
    %246 = vrot.lane.b32.xlu0 %v244, 64
    %v247 = vpop.permute.xlu0 %246
    %v249 = vadd.f32 %v160, %v247
    %v250 = vtanh.pop %v249
    %v251 = vsub.f32 1.0, %v233
    %253 = vrot.lane.b32.xlu0 %v250, 96
    %v254 = vpop.permute.xlu0 %253
    %v256 = vmul.f32 %v251, %v254
    %258 = vrot.lane.b32.xlu0 %v184, 32
    %v259 = vpop.permute.xlu0 %258
    %v261 = vmul.f32 %v233, %v259
    %v262 = vadd.f32 %v256, %v261
    %v263 = vpack.c.bf16 %v262, %v262
    %265 = vrot.lane.b32.xlu0 %v263, 96
    %v266 = vpop.permute.xlu0 %265
    %v268 = vsel %vm137, %v266, 0
    %270 = vmatpush.bf16.msra.mxu0 0
    %271 = vmatpush.bf16.msra.mxu0 0
    %272 = vmatpush.bf16.msra.mxu0 0
    %273 = vmatpush.bf16.msra.mxu0 0
    %274 = vmatpush.bf16.msra.mxu0 0
    %275 = vmatpush.bf16.msra.mxu0 0
    %276 = vmatpush.bf16.msra.mxu0 %v195
    %277 = vmatpush.bf16.msra.mxu0 %v194
    %278 = vmatmul.bf16.gmra.mxu0 %v268
    %v279 = vpop.f32.mrf.mxu0
    %v280 = vadd.f32 0.0, %v279
    %v281 = vpop.f32.mrf.mxu0
    %282 = vdwg.mxu0
    %v283 = vadd.f32 %v162, %v280
    %v284 = vxor.u32 %v283, 2147483648
    %v285 = vmul.f32 %v284, 1.442695
    %v286 = vpow.pop %v285
    %v287 = vadd.f32 %v286, 1.0
    %v288 = vrcp.pop %v287
    %v289 = vmul.f32 %v287, %v288
    %v290 = vsub.f32 1.0, %v289
    %v291 = vmul.f32 %v288, %v290
    %v292 = vadd.f32 %v288, %v291
    %vm293 = vweird.f32 %v287
    %vm294 = vweird.f32 %v288
    %vm295 = vmor %vm293, %vm294
    %v296 = vsel %vm295, %v288, %v292
    %v297 = vand.u32 2147483647, %v287
    %vm298 = vcmp.eq.f32.partialorder %v297, 8.507059e+37
    %v299 = vand.u32 %v287, 2147483648
    %v300 = vor.u32 1.1754944e-38, %v299
    %v301 = vsel %vm298, %v300, %v296
    %v302 = vmul.f32 1.0, %v301
    %v303 = vadd.f32 %v280, %v237
    %305 = vrot.lane.b32.xlu0 %v303, 64
    %v306 = vpop.permute.xlu0 %305
    %v308 = vmul.f32 %v302, %v306
    %310 = vrot.lane.b32.xlu0 %v308, 64
    %v311 = vpop.permute.xlu0 %310
    %v313 = vadd.f32 %v162, %v311
    %v314 = vtanh.pop %v313
    %v315 = vsub.f32 1.0, %v302
    %317 = vrot.lane.b32.xlu0 %v314, 96
    %v318 = vpop.permute.xlu0 %317
    %v320 = vmul.f32 %v315, %v318
    %v321 = vmul.f32 %v302, %v262
    %v322 = vadd.f32 %v320, %v321
    %v323 = vpack.c.bf16 %v322, %v322
    %325 = vrot.lane.b32.xlu0 %v323, 96
    %v326 = vpop.permute.xlu0 %325
    %v328 = vsel %vm137, %v326, 0
    %330 = vmatpush.bf16.msra.mxu0 0
    %331 = vmatpush.bf16.msra.mxu0 0
    %332 = vmatpush.bf16.msra.mxu0 0
    %333 = vmatpush.bf16.msra.mxu0 0
    %334 = vmatpush.bf16.msra.mxu0 0
    %335 = vmatpush.bf16.msra.mxu0 0
    %336 = vmatpush.bf16.msra.mxu0 %v195
    %337 = vmatpush.bf16.msra.mxu0 %v194
    %338 = vmatmul.bf16.gmra.mxu0 %v328
    %v339 = vpop.f32.mrf.mxu0
    %v340 = vadd.f32 0.0, %v339
    %v341 = vpop.f32.mrf.mxu0
    %342 = vdwg.mxu0
    %v343 = vadd.f32 %v165, %v340
    %v344 = vxor.u32 %v343, 2147483648
    %v345 = vmul.f32 %v344, 1.442695
    %v346 = vpow.pop %v345
    %v347 = vadd.f32 %v346, 1.0
    %v348 = vrcp.pop %v347
    %v349 = vmul.f32 %v347, %v348
    %v350 = vsub.f32 1.0, %v349
    %v351 = vmul.f32 %v348, %v350
    %v352 = vadd.f32 %v348, %v351
    %vm353 = vweird.f32 %v347
    %vm354 = vweird.f32 %v348
    %vm355 = vmor %vm353, %vm354
    %v356 = vsel %vm355, %v348, %v352
    %v357 = vand.u32 2147483647, %v347
    %vm358 = vcmp.eq.f32.partialorder %v357, 8.507059e+37
    %v359 = vand.u32 %v347, 2147483648
    %v360 = vor.u32 1.1754944e-38, %v359
    %v361 = vsel %vm358, %v360, %v356
    %v362 = vmul.f32 1.0, %v361
    %v363 = vadd.f32 %v340, %v237
    %365 = vrot.lane.b32.xlu0 %v363, 64
    %v366 = vpop.permute.xlu0 %365
    %v368 = vmul.f32 %v362, %v366
    %370 = vrot.lane.b32.xlu0 %v368, 64
    %v371 = vpop.permute.xlu0 %370
    %v373 = vadd.f32 %v165, %v371
    %v374 = vtanh.pop %v373
    %v375 = vsub.f32 1.0, %v362
    %377 = vrot.lane.b32.xlu0 %v374, 96
    %v378 = vpop.permute.xlu0 %377
    %v380 = vmul.f32 %v375, %v378
    %v381 = vmul.f32 %v362, %v322
    %v382 = vadd.f32 %v380, %v381
    %v383 = vpack.c.bf16 %v382, %v382
    %385 = vrot.lane.b32.xlu0 %v383, 96
    %v386 = vpop.permute.xlu0 %385
    %v388 = vsel %vm137, %v386, 0
    %390 = vmatpush.bf16.msra.mxu0 0
    %391 = vmatpush.bf16.msra.mxu0 0
    %392 = vmatpush.bf16.msra.mxu0 0
    %393 = vmatpush.bf16.msra.mxu0 0
    %394 = vmatpush.bf16.msra.mxu0 0
    %395 = vmatpush.bf16.msra.mxu0 0
    %396 = vmatpush.bf16.msra.mxu0 %v195
    %397 = vmatpush.bf16.msra.mxu0 %v194
    %398 = vmatmul.bf16.gmra.mxu0 %v388
    %v399 = vpop.f32.mrf.mxu0
    %v400 = vadd.f32 0.0, %v399
    %v401 = vpop.f32.mrf.mxu0
    %402 = vdwg.mxu0
    %v403 = vadd.f32 %v167, %v400
    %v404 = vxor.u32 %v403, 2147483648
    %v405 = vmul.f32 %v404, 1.442695
    %v406 = vpow.pop %v405
    %v407 = vadd.f32 %v406, 1.0
    %v408 = vrcp.pop %v407
    %v409 = vmul.f32 %v407, %v408
    %v410 = vsub.f32 1.0, %v409
    %v411 = vmul.f32 %v408, %v410
    %v412 = vadd.f32 %v408, %v411
    %vm413 = vweird.f32 %v407
    %vm414 = vweird.f32 %v408
    %vm415 = vmor %vm413, %vm414
    %v416 = vsel %vm415, %v408, %v412
    %v417 = vand.u32 2147483647, %v407
    %vm418 = vcmp.eq.f32.partialorder %v417, 8.507059e+37
    %v419 = vand.u32 %v407, 2147483648
    %v420 = vor.u32 1.1754944e-38, %v419
    %v421 = vsel %vm418, %v420, %v416
    %v422 = vmul.f32 1.0, %v421
    %v423 = vadd.f32 %v400, %v237
    %425 = vrot.lane.b32.xlu0 %v423, 64
    %v426 = vpop.permute.xlu0 %425
    %v428 = vmul.f32 %v422, %v426
    %430 = vrot.lane.b32.xlu0 %v428, 64
    %v431 = vpop.permute.xlu0 %430
    %v433 = vadd.f32 %v167, %v431
    %v434 = vtanh.pop %v433
    %v435 = vsub.f32 1.0, %v422
    %437 = vrot.lane.b32.xlu0 %v434, 96
    %v438 = vpop.permute.xlu0 %437
    %v440 = vmul.f32 %v435, %v438
    %v441 = vmul.f32 %v422, %v382
    %v442 = vadd.f32 %v440, %v441
    %v443 = vpack.c.bf16 %v442, %v442
    %445 = vrot.lane.b32.xlu0 %v443, 96
    %v446 = vpop.permute.xlu0 %445
    %v448 = vsel %vm137, %v446, 0
    %450 = vmatpush.bf16.msra.mxu0 0
    %451 = vmatpush.bf16.msra.mxu0 0
    %452 = vmatpush.bf16.msra.mxu0 0
    %453 = vmatpush.bf16.msra.mxu0 0
    %454 = vmatpush.bf16.msra.mxu0 0
    %455 = vmatpush.bf16.msra.mxu0 0
    %456 = vmatpush.bf16.msra.mxu0 %v195
    %457 = vmatpush.bf16.msra.mxu0 %v194
    %458 = vmatmul.bf16.gmra.mxu0 %v448
    %v459 = vpop.f32.mrf.mxu0
    %v460 = vadd.f32 0.0, %v459
    %v461 = vpop.f32.mrf.mxu0
    %462 = vdwg.mxu0
    %v463 = vadd.f32 %v170, %v460
    %v464 = vxor.u32 %v463, 2147483648
    %v465 = vmul.f32 %v464, 1.442695
    %v466 = vpow.pop %v465
    %v467 = vadd.f32 %v466, 1.0
    %v468 = vrcp.pop %v467
    %v469 = vmul.f32 %v467, %v468
    %v470 = vsub.f32 1.0, %v469
    %v471 = vmul.f32 %v468, %v470
    %v472 = vadd.f32 %v468, %v471
    %vm473 = vweird.f32 %v467
    %vm474 = vweird.f32 %v468
    %vm475 = vmor %vm473, %vm474
    %v476 = vsel %vm475, %v468, %v472
    %v477 = vand.u32 2147483647, %v467
    %vm478 = vcmp.eq.f32.partialorder %v477, 8.507059e+37
    %v479 = vand.u32 %v467, 2147483648
    %v480 = vor.u32 1.1754944e-38, %v479
    %v481 = vsel %vm478, %v480, %v476
    %v482 = vmul.f32 1.0, %v481
    %v483 = vadd.f32 %v460, %v237
    %485 = vrot.lane.b32.xlu0 %v483, 64
    %v486 = vpop.permute.xlu0 %485
    %v488 = vmul.f32 %v482, %v486
    %490 = vrot.lane.b32.xlu0 %v488, 64
    %v491 = vpop.permute.xlu0 %490
    %v493 = vadd.f32 %v170, %v491
    %v494 = vtanh.pop %v493
    %v495 = vsub.f32 1.0, %v482
    %497 = vrot.lane.b32.xlu0 %v494, 96
    %v498 = vpop.permute.xlu0 %497
    %v500 = vmul.f32 %v495, %v498
    %v501 = vmul.f32 %v482, %v442
    %v502 = vadd.f32 %v500, %v501
    %v503 = vpack.c.bf16 %v502, %v502
    %505 = vrot.lane.b32.xlu0 %v503, 96
    %v506 = vpop.permute.xlu0 %505
    %v508 = vsel %vm137, %v506, 0
    %510 = vmatpush.bf16.msra.mxu0 0
    %511 = vmatpush.bf16.msra.mxu0 0
    %512 = vmatpush.bf16.msra.mxu0 0
    %513 = vmatpush.bf16.msra.mxu0 0
    %514 = vmatpush.bf16.msra.mxu0 0
    %515 = vmatpush.bf16.msra.mxu0 0
    %516 = vmatpush.bf16.msra.mxu0 %v195
    %517 = vmatpush.bf16.msra.mxu0 %v194
    %518 = vmatmul.bf16.gmra.mxu0 %v508
    %v519 = vpop.f32.mrf.mxu0
    %v520 = vadd.f32 0.0, %v519
    %v521 = vpop.f32.mrf.mxu0
    %522 = vdwg.mxu0
    %v523 = vadd.f32 %v172, %v520
    %v524 = vxor.u32 %v523, 2147483648
    %v525 = vmul.f32 %v524, 1.442695
    %v526 = vpow.pop %v525
    %v527 = vadd.f32 %v526, 1.0
    %v528 = vrcp.pop %v527
    %v529 = vmul.f32 %v527, %v528
    %v530 = vsub.f32 1.0, %v529
    %v531 = vmul.f32 %v528, %v530
    %v532 = vadd.f32 %v528, %v531
    %vm533 = vweird.f32 %v527
    %vm534 = vweird.f32 %v528
    %vm535 = vmor %vm533, %vm534
    %v536 = vsel %vm535, %v528, %v532
    %v537 = vand.u32 2147483647, %v527
    %vm538 = vcmp.eq.f32.partialorder %v537, 8.507059e+37
    %v539 = vand.u32 %v527, 2147483648
    %v540 = vor.u32 1.1754944e-38, %v539
    %v541 = vsel %vm538, %v540, %v536
    %v542 = vmul.f32 1.0, %v541
    %v543 = vadd.f32 %v520, %v237
    %545 = vrot.lane.b32.xlu0 %v543, 64
    %v546 = vpop.permute.xlu0 %545
    %v548 = vmul.f32 %v542, %v546
    %550 = vrot.lane.b32.xlu0 %v548, 64
    %v551 = vpop.permute.xlu0 %550
    %v553 = vadd.f32 %v172, %v551
    %v554 = vtanh.pop %v553
    %v555 = vsub.f32 1.0, %v542
    %557 = vrot.lane.b32.xlu0 %v554, 96
    %v558 = vpop.permute.xlu0 %557
    %v560 = vmul.f32 %v555, %v558
    %v561 = vmul.f32 %v542, %v502
    %v562 = vadd.f32 %v560, %v561
    %v563 = vpack.c.bf16 %v562, %v562
    %565 = vrot.lane.b32.xlu0 %v563, 96
    %v566 = vpop.permute.xlu0 %565
    %v568 = vsel %vm137, %v566, 0
    %570 = vmatpush.bf16.msra.mxu0 0
    %571 = vmatpush.bf16.msra.mxu0 0
    %572 = vmatpush.bf16.msra.mxu0 0
    %573 = vmatpush.bf16.msra.mxu0 0
    %574 = vmatpush.bf16.msra.mxu0 0
    %575 = vmatpush.bf16.msra.mxu0 0
    %576 = vmatpush.bf16.msra.mxu0 %v195
    %577 = vmatpush.bf16.msra.mxu0 %v194
    %578 = vmatmul.bf16.gmra.mxu0 %v568
    %v579 = vpop.f32.mrf.mxu0
    %v580 = vadd.f32 0.0, %v579
    %v581 = vpop.f32.mrf.mxu0
    %582 = vdwg.mxu0
    %v583 = vadd.f32 %v175, %v580
    %v584 = vxor.u32 %v583, 2147483648
    %v585 = vmul.f32 %v584, 1.442695
    %v586 = vpow.pop %v585
    %v587 = vadd.f32 %v586, 1.0
    %v588 = vrcp.pop %v587
    %v589 = vmul.f32 %v587, %v588
    %v590 = vsub.f32 1.0, %v589
    %v591 = vmul.f32 %v588, %v590
    %v592 = vadd.f32 %v588, %v591
    %vm593 = vweird.f32 %v587
    %vm594 = vweird.f32 %v588
    %vm595 = vmor %vm593, %vm594
    %v596 = vsel %vm595, %v588, %v592
    %v597 = vand.u32 2147483647, %v587
    %vm598 = vcmp.eq.f32.partialorder %v597, 8.507059e+37
    %v599 = vand.u32 %v587, 2147483648
    %v600 = vor.u32 1.1754944e-38, %v599
    %v601 = vsel %vm598, %v600, %v596
    %v602 = vmul.f32 1.0, %v601
    %v603 = vadd.f32 %v580, %v237
    %605 = vrot.lane.b32.xlu0 %v603, 64
    %v606 = vpop.permute.xlu0 %605
    %v608 = vmul.f32 %v602, %v606
    %610 = vrot.lane.b32.xlu0 %v608, 64
    %v611 = vpop.permute.xlu0 %610
    %v613 = vadd.f32 %v175, %v611
    %v614 = vtanh.pop %v613
    %v615 = vsub.f32 1.0, %v602
    %617 = vrot.lane.b32.xlu0 %v614, 96
    %v618 = vpop.permute.xlu0 %617
    %v620 = vmul.f32 %v615, %v618
    %v621 = vmul.f32 %v602, %v562
    %v622 = vadd.f32 %v620, %v621
    %v623 = vpack.c.bf16 %v622, %v622
    %625 = vrot.lane.b32.xlu0 %v623, 96
    %v626 = vpop.permute.xlu0 %625
    %v628 = vsel %vm137, %v626, 0
    %630 = vmatpush.bf16.msra.mxu0 0
    %631 = vmatpush.bf16.msra.mxu0 0
    %632 = vmatpush.bf16.msra.mxu0 0
    %633 = vmatpush.bf16.msra.mxu0 0
    %634 = vmatpush.bf16.msra.mxu0 0
    %635 = vmatpush.bf16.msra.mxu0 0
    %636 = vmatpush.bf16.msra.mxu0 %v195
    %637 = vmatpush.bf16.msra.mxu0 %v194
    %638 = vmatmul.bf16.gmra.mxu0 %v628
    %v639 = vpop.f32.mrf.mxu0
    %v640 = vadd.f32 0.0, %v639
    %v641 = vpop.f32.mrf.mxu0
    %642 = vdwg.mxu0
    %v643 = vadd.f32 %v177, %v640
    %v644 = vxor.u32 %v643, 2147483648
    %v645 = vmul.f32 %v644, 1.442695
    %v646 = vpow.pop %v645
    %v647 = vadd.f32 %v646, 1.0
    %v648 = vrcp.pop %v647
    %v649 = vmul.f32 %v647, %v648
    %v650 = vsub.f32 1.0, %v649
    %v651 = vmul.f32 %v648, %v650
    %v652 = vadd.f32 %v648, %v651
    %vm653 = vweird.f32 %v647
    %vm654 = vweird.f32 %v648
    %vm655 = vmor %vm653, %vm654
    %v656 = vsel %vm655, %v648, %v652
    %v657 = vand.u32 2147483647, %v647
    %vm658 = vcmp.eq.f32.partialorder %v657, 8.507059e+37
    %v659 = vand.u32 %v647, 2147483648
    %v660 = vor.u32 1.1754944e-38, %v659
    %v661 = vsel %vm658, %v660, %v656
    %v662 = vmul.f32 1.0, %v661
    %v663 = vadd.f32 %v640, %v237
    %665 = vrot.lane.b32.xlu0 %v663, 64
    %v666 = vpop.permute.xlu0 %665
    %v668 = vmul.f32 %v662, %v666
    %670 = vrot.lane.b32.xlu0 %v668, 64
    %v671 = vpop.permute.xlu0 %670
    %v673 = vadd.f32 %v177, %v671
    %v674 = vtanh.pop %v673
    %v675 = vsub.f32 1.0, %v662
    %677 = vrot.lane.b32.xlu0 %v674, 96
    %v678 = vpop.permute.xlu0 %677
    %v680 = vmul.f32 %v675, %v678
    %v681 = vmul.f32 %v662, %v622
    %v682 = vadd.f32 %v680, %v681
    %s683 = scalar_lea.vmem %s1, 16
    %v684 = vld [vmem:[%s683] sm:$0xf]
    %v685 = vld [vmem:[%s683 + $0x4] sm:$0xf]
    %v686 = vld [vmem:[%s683 + $0x8] sm:$0xf]
    %v687 = vld [vmem:[%s683 + $0xc] sm:$0xf]
    %s688 = scalar_lea.vmem %s3, 1
    %v689 = vld [vmem:[%s688] sm:$0x1]
    %v691 = vperm.slane %v689, 0
    %v697 = vunpack.c.l.b16 %v684
    %v698 = vunpack.c.l.b16 %v685
    %v699 = vunpack.c.l.b16 %v686
    %v700 = vunpack.c.l.b16 %v687
    %v701 = vpack.c.b16 %v698, %v697
    %v702 = vpack.c.b16 %v700, %v699
    %v706 = vsel %vm137, %v96, 0
    %708 = vmatpush.bf16.msra.mxu0 0
    %709 = vmatpush.bf16.msra.mxu0 0
    %710 = vmatpush.bf16.msra.mxu0 0
    %711 = vmatpush.bf16.msra.mxu0 0
    %712 = vmatpush.bf16.msra.mxu0 0
    %713 = vmatpush.bf16.msra.mxu0 0
    %714 = vmatpush.bf16.msra.mxu0 %v702
    %715 = vmatpush.bf16.msra.mxu0 %v701
    %716 = vmatmul.bf16.gmra.mxu0 %v706
    %v717 = vpop.f32.mrf.mxu0
    %v718 = vadd.f32 %v691, %v717
    %v719 = vpop.f32.mrf.mxu0
    %720 = vdwg.mxu0
    %s721 = scalar_lea.vmem %s5, 8
    %v722 = vld [vmem:[%s721] sm:$0xff]
    %v723 = vpack.c.bf16 %v722, %v722
    %s724 = scalar_lea.vmem %s2, 16
    %v725 = vld [vmem:[%s724] sm:$0xf]
    %v726 = vld [vmem:[%s724 + $0x4] sm:$0xf]
    %v727 = vld [vmem:[%s724 + $0x8] sm:$0xf]
    %v728 = vld [vmem:[%s724 + $0xc] sm:$0xf]
    %v733 = vunpack.c.l.b16 %v725
    %v734 = vunpack.c.l.b16 %v726
    %v735 = vunpack.c.l.b16 %v727
    %v736 = vunpack.c.l.b16 %v728
    %v737 = vpack.c.b16 %v734, %v733
    %v738 = vpack.c.b16 %v736, %v735
    %v742 = vsel %vm137, %v723, 0
    %744 = vmatpush.bf16.msra.mxu0 0
    %745 = vmatpush.bf16.msra.mxu0 0
    %746 = vmatpush.bf16.msra.mxu0 0
    %747 = vmatpush.bf16.msra.mxu0 0
    %748 = vmatpush.bf16.msra.mxu0 0
    %749 = vmatpush.bf16.msra.mxu0 0
    %750 = vmatpush.bf16.msra.mxu0 %v738
    %751 = vmatpush.bf16.msra.mxu0 %v737
    %752 = vmatmul.bf16.gmra.mxu0 %v742
    %v753 = vpop.f32.mrf.mxu0
    %v754 = vadd.f32 0.0, %v753
    %v755 = vpop.f32.mrf.mxu0
    %756 = vdwg.mxu0
    %s757 = scalar_lea.vmem %s4, 1
    %v758 = vld [vmem:[%s757] sm:$0x1]
    %v759 = vadd.f32 %v718, %v754
    %v760 = vxor.u32 %v759, 2147483648
    %v761 = vmul.f32 %v760, 1.442695
    %v762 = vpow.pop %v761
    %v763 = vadd.f32 %v762, 1.0
    %v764 = vrcp.pop %v763
    %v765 = vmul.f32 %v763, %v764
    %v766 = vsub.f32 1.0, %v765
    %v767 = vmul.f32 %v764, %v766
    %v768 = vadd.f32 %v764, %v767
    %vm769 = vweird.f32 %v763
    %vm770 = vweird.f32 %v764
    %vm771 = vmor %vm769, %vm770
    %v772 = vsel %vm771, %v764, %v768
    %v773 = vand.u32 2147483647, %v763
    %vm774 = vcmp.eq.f32.partialorder %v773, 8.507059e+37
    %v775 = vand.u32 %v763, 2147483648
    %v776 = vor.u32 1.1754944e-38, %v775
    %v777 = vsel %vm774, %v776, %v772
    %v778 = vmul.f32 1.0, %v777
    %v780 = vperm.slane %v758, 0
    %781 = vrot.lane.b32.xlu0 %v780, 64
    %v782 = vpop.permute.xlu0 %781
    %v784 = vadd.f32 %v754, %v782
    %786 = vrot.lane.b32.xlu0 %v784, 64
    %v787 = vpop.permute.xlu0 %786
    %v789 = vmul.f32 %v778, %v787
    %791 = vrot.lane.b32.xlu0 %v789, 64
    %v792 = vpop.permute.xlu0 %791
    %v794 = vadd.f32 %v718, %v792
    %v795 = vtanh.pop %v794
    %v796 = vsub.f32 1.0, %v778
    %798 = vrot.lane.b32.xlu0 %v795, 96
    %v799 = vpop.permute.xlu0 %798
    %v801 = vmul.f32 %v796, %v799
    %803 = vrot.lane.b32.xlu0 %v722, 32
    %v804 = vpop.permute.xlu0 %803
    %v806 = vmul.f32 %v778, %v804
    %v807 = vadd.f32 %v801, %v806
    %809 = vrot.lane.b32.xlu0 %v682, 96
    %v810 = vpop.permute.xlu0 %809
    %v812 = vsel %vm137, %v810, %v807
    %v813 = vpack.c.bf16 %v812, %v812
    %v814 = vld [vmem:[%s6] sm:$0xf]
    %v815 = vld [vmem:[%s6 + $0x4] sm:$0xf]
    %v816 = vld [vmem:[%s6 + $0x8] sm:$0xf]
    %v817 = vld [vmem:[%s6 + $0xc] sm:$0xf]
    %v818 = vld [vmem:[%s6 + $0x10] sm:$0xf]
    %v819 = vld [vmem:[%s6 + $0x14] sm:$0xf]
    %v820 = vld [vmem:[%s6 + $0x18] sm:$0xf]
    %v821 = vld [vmem:[%s6 + $0x1c] sm:$0xf]
    %v822 = vld [vmem:[%s7] sm:$0x1]
    %v824 = vperm.slane %v822, 0
    %v834 = vunpack.c.l.b16 %v814
    %v835 = vunpack.c.l.b16 %v815
    %v836 = vunpack.c.l.b16 %v816
    %v837 = vunpack.c.l.b16 %v817
    %v838 = vunpack.c.l.b16 %v818
    %v839 = vunpack.c.l.b16 %v819
    %v840 = vunpack.c.l.b16 %v820
    %v841 = vunpack.c.l.b16 %v821
    %v842 = vpack.c.b16 %v835, %v834
    %v843 = vpack.c.b16 %v837, %v836
    %v844 = vpack.c.b16 %v839, %v838
    %v845 = vpack.c.b16 %v841, %v840
    %vm850 = vcmask 523264
    %v852 = vsel %vm850, %v813, 0
    %854 = vmatpush.bf16.msra.mxu0 0
    %855 = vmatpush.bf16.msra.mxu0 0
    %856 = vmatpush.bf16.msra.mxu0 0
    %857 = vmatpush.bf16.msra.mxu0 0
    %858 = vmatpush.bf16.msra.mxu0 %v845
    %859 = vmatpush.bf16.msra.mxu0 %v844
    %860 = vmatpush.bf16.msra.mxu0 %v843
    %861 = vmatpush.bf16.msra.mxu0 %v842
    %862 = vmatmul.bf16.gmra.mxu0 %v852
    %v863 = vpop.f32.mrf.mxu0
    %v864 = vadd.f32 %v824, %v863
    %v865 = vpop.f32.mrf.mxu0
    %866 = vdwg.mxu0
    %vm867 = vcmask 64512
    %868 = vst.msk [vmem:[#allocation2] sm:$0xff] %vm867, %v864
    // Predicated region
    $region34: #{tpu_custom_call.1} parent=1 // pred_check
      _
    $region35: #{tpu_custom_call.1} parent=1 // pred_check_branch
      %870 = sbr.rel (0) target = $region37
    $region36: #{tpu_custom_call.1} parent=1 // pred_region
      %872 = vsyncadd [#allocation3], 0
      %s874 = sshll.u32 [#allocation2], 4
      %s875 = int_to_ptr.vmem [resolvable:$true] %s874
      %s876 = sshll.u32 %s8, 4
      %s877 = int_to_ptr.hbm [resolvable:$true] %s876
      %879 = dma.vmem_to_hbm [thread:$0]  %s875, 128, %s877, [#allocation3]
    $region37: #{tpu_custom_call.1} parent=1 // pred_fallthru
      _
    // Predicated region
    $region38: #{tpu_custom_call.1} parent=1 // pred_check
      _
    $region39: #{tpu_custom_call.1} parent=1 // pred_check_branch
      %881 = sbr.rel (0) target = $region41
    $region40: #{tpu_custom_call.1} parent=1 // pred_region
      %883 = dma.done [#allocation3], 128
    $region41: #{tpu_custom_call.1} parent=1 // pred_fallthru
      _
    %884 = vsyncpa [#allocation3], 1

</llo_original>
